<compile_context>
chip_gen: v7x
topology: tpu7x:2x2x1
jax: 0.10.0
libtpu: 0.0.40
codegen_flags: <defaults>
</compile_context>

<pallas_src>
import jax
import jax.numpy as jnp
from jax.experimental import pallas as pl
from jax.experimental.pallas import tpu as pltpu

_LANE = 128


def _round_up(a: int, b: int) -> int:
    return (a + b - 1) // b * b


def _downsample_gemm_kernel(p_ref, w_ref, b_ref, o_ref, acc_ref):
    """One (tc x tm) output tile, reduced over the K grid axis (last, 'arbitrary').

    p_ref:   (tk, tm)  patch block, M (= per-image Ho*Wo tile) on lanes
    w_ref:   (tc, tk)  weight block (constant index along n / M grid axes)
    b_ref:   (tc, 1)   bias block
    o_ref:   (tc, tm)  output block (batch dim squeezed away)
    acc_ref: (tc, tm)  f32 accumulator scratch, persists across K steps
    """
    kj = pl.program_id(3)

    @pl.when(kj == 0)
    def _init():
        acc_ref[...] = jnp.zeros_like(acc_ref)

    acc_ref[...] += jnp.dot(w_ref[...], p_ref[...],
                            preferred_element_type=jnp.float32)

    @pl.when(kj == pl.num_programs(3) - 1)
    def _finalize():
        o_ref[...] = (acc_ref[...] + b_ref[...]).astype(o_ref.dtype)


def _vmem_capacity_bytes() -> int:
    try:
        return int(pltpu.get_tpu_info().vmem_capacity_bytes)
    except Exception:
        return 64 * 1024 * 1024  # assume the smallest (v7x) physical VMEM


def _pick_tiles(N, Cout, K, HoWo, in_itemsize, out_itemsize):
    """Generation/VMEM-aware tile selection.

    Returns (tc, Coutp, tk, Kp, tm, Mp, vmem_limit_bytes).
    """
    # Cout tiling: keep output-row blocks MXU-friendly; pad Cout only when tiled.
    if Cout <= 512:
        tc = Cout
    elif Cout % 256 == 0:
        tc = 256
    elif Cout % 128 == 0:
        tc = 128
    else:
        tc = 256
    Coutp = _round_up(Cout, tc)

    # K tiling: single reduction step for moderate K, else 128-aligned 512 chunks.
    tk = K if K <= 2048 else 512
    Kp = _round_up(K, tk)

    # VMEM budget: v5e/v6e 128 MiB physical (16/32 MiB scoped default), v7x 64 MiB.
    vmem_cap = _vmem_capacity_bytes()
    target = max(8 << 20, min(vmem_cap // 4, 32 << 20))

    # Per-step footprint: double-buffered patch/weight/bias/output blocks + f32 acc.
    fixed = 2 * tc * tk * in_itemsize + 2 * tc * 4
    per_tm = 2 * tk * in_itemsize + 2 * tc * out_itemsize + tc * 4
    tm_cap = (target - fixed) // per_tm
    tm_cap = max(_LANE, (tm_cap // _LANE) * _LANE)
    tm_cap = min(tm_cap, 32768)  # fewer, larger grid steps (~0.35us/step overhead)

    Mp = _round_up(max(HoWo, _LANE), _LANE)  # lane-dense stores even for tiny images
    tm = min(tm_cap, Mp)
    Mp = _round_up(HoWo, tm)

    # v7x megacore: prefer >= 2 parallel grid steps so both TensorCores get work.
    if N * (Coutp // tc) * (Mp // tm) < 2 and tm % (2 * _LANE) == 0:
        tm //= 2

    need = fixed + per_tm * tm
    vmem_limit = int(min(vmem_cap, max(need + (4 << 20), 16 << 20)))
    return tc, Coutp, tk, Kp, tm, Mp, vmem_limit


def downsample_pallas(x, weight, bias, kernel_size=2, *, compute_dtype=None):
    """Equivalent of nn.Conv2d(in_c, out_c, kernel_size=k, stride=k)(x).

    x:      (N, Cin, H, W)   NCHW (PyTorch convention)
    weight: (Cout, Cin, k, k)
    bias:   (Cout,)
    compute_dtype: optional GEMM-input dtype (e.g. jnp.bfloat16); accumulation stays
        f32 and the output is cast back to x.dtype.  Default keeps f32 end-to-end.
    returns (N, Cout, H//k, W//k) NCHW
    """
    k = int(kernel_size)
    N, Cin, H, W = x.shape
    Cout = weight.shape[0]
    Ho, Wo = H // k, W // k
    K = Cin * k * k
    HoWo = Ho * Wo

    in_dtype = jnp.dtype(x.dtype if compute_dtype is None else compute_dtype)
    out_dtype = jnp.dtype(x.dtype)

    tc, Coutp, tk, Kp, tm, Mp, vmem_limit = _pick_tiles(
        N, Cout, K, HoWo, in_dtype.itemsize, out_dtype.itemsize)

    # ---- layout glue (XLA): space-to-depth into per-image (K, Ho*Wo) slabs ----
    # K flatten order (ci, kh, kw) matches weight.reshape(Cout, Cin*k*k).
    xs = x[:, :, : Ho * k, : Wo * k].reshape(N, Cin, Ho, k, Wo, k)
    patches = jnp.transpose(xs, (0, 1, 3, 5, 2, 4)).reshape(N, K, HoWo)
    patches = patches.astype(in_dtype)
    if Kp != K or Mp != HoWo:
        patches = jnp.pad(patches, ((0, 0), (0, Kp - K), (0, Mp - HoWo)))

    w2 = weight.reshape(Cout, K).astype(in_dtype)
    b2 = bias.reshape(Cout, 1).astype(jnp.float32)
    if Coutp != Cout or Kp != K:
        w2 = jnp.pad(w2, ((0, Coutp - Cout), (0, Kp - K)))
        b2 = jnp.pad(b2, ((0, Coutp - Cout), (0, 0)))

    grid = (N, Coutp // tc, Mp // tm, Kp // tk)

    cost = pl.CostEstimate(
        flops=2 * N * Mp * Kp * Coutp,
        transcendentals=0,
        bytes_accessed=int((N * Kp * Mp + Coutp * Kp) * in_dtype.itemsize
                           + Coutp * 4
                           + N * Coutp * Mp * out_dtype.itemsize),
    )

    out = pl.pallas_call(
        _downsample_gemm_kernel,
        out_shape=jax.ShapeDtypeStruct((N, Coutp, Mp), out_dtype),
        grid_spec=pltpu.PrefetchScalarGridSpec(
            num_scalar_prefetch=0,
            grid=grid,
            in_specs=[
                pl.BlockSpec((pl.Squeezed(), tk, tm), lambda n, c, i, j: (n, j, i)),
                # Constant along n / i: Pallas skips re-fetching unchanged blocks.
                pl.BlockSpec((tc, tk), lambda n, c, i, j: (c, j)),
                pl.BlockSpec((tc, 1), lambda n, c, i, j: (c, 0)),
            ],
            out_specs=pl.BlockSpec((pl.Squeezed(), tc, tm),
                                   lambda n, c, i, j: (n, c, i)),
            scratch_shapes=[pltpu.VMEM((tc, tm), jnp.float32)],
        ),
        compiler_params=pltpu.CompilerParams(
            dimension_semantics=("parallel", "parallel", "parallel", "arbitrary"),
            vmem_limit_bytes=vmem_limit,
        ),
        cost_estimate=cost,
    )(patches, w2, b2)

    # Un-pad and reshape -- layout-compatible, no output transpose.
    return out[:, :Cout, :HoWo].reshape(N, Cout, Ho, Wo)


if __name__ == "__main__":
    # Shapes consistent with DownSample(in_channels=4, out_channels=8, kernel_size=2)
    N, Cin, H, W = 2, 4, 16, 16
    Cout, k = 8, 2

    key = jax.random.PRNGKey(0)
    kx, kw_, kb = jax.random.split(key, 3)

    x = jax.random.normal(kx, (N, Cin, H, W), dtype=jnp.float32)
    weight = jax.random.normal(kw_, (Cout, Cin, k, k), dtype=jnp.float32) * 0.1
    bias = jax.random.normal(kb, (Cout,), dtype=jnp.float32) * 0.1

    out = downsample_pallas(x, weight, bias, kernel_size=k)
    out = jax.block_until_ready(out)

    # Reference: lax conv with PyTorch NCHW/OIHW conventions.
    ref = jax.lax.conv_general_dilated(
        x, weight, window_strides=(k, k), padding="VALID",
        dimension_numbers=("NCHW", "OIHW", "NCHW"),
    ) + bias.reshape(1, Cout, 1, 1)

    assert out.shape == (N, Cout, H // k, W // k)
    assert jnp.allclose(out, ref, atol=1e-4, rtol=1e-4)

    print("KERNEL_OK")
</pallas_src>

<mosaic_0001>
module attributes {stable_mosaic.version = 11 : i64} {
  func.func @_downsample_gemm_kernel(%arg0: i32, %arg1: i32, %arg2: i32, %arg3: i32, %arg4: memref<1x16x128xf32, #tpu.memory_space<vmem>>, %arg5: memref<8x16xf32, #tpu.memory_space<vmem>>, %arg6: memref<8x1xf32, #tpu.memory_space<vmem>>, %arg7: memref<1x8x128xf32, #tpu.memory_space<vmem>>, %arg8: memref<8x128xf32, #tpu.memory_space<vmem>>) attributes {dimension_semantics = [#tpu.dimension_semantics<parallel>, #tpu.dimension_semantics<parallel>, #tpu.dimension_semantics<parallel>, #tpu.dimension_semantics<arbitrary>], iteration_bounds = array<i64: 2, 1, 1, 1>, scalar_prefetch = 0 : i64, scratch_operands = 1 : i64, tpu.core_type = #tpu.core_type<tc>, window_params = [{transform_indices = @transform_0, window_bounds = array<i64: 1, 16, 128>}, {transform_indices = @transform_1, window_bounds = array<i64: 8, 16>}, {transform_indices = @transform_2, window_bounds = array<i64: 8, 1>}, {transform_indices = @transform_3, window_bounds = array<i64: 1, 8, 128>}]} {
    %c0_i32 = arith.constant 0 : i32
    %0 = arith.cmpi eq, %arg3, %c0_i32 : i32
    %1 = arith.extui %0 : i1 to i32
    %c0_i32_0 = arith.constant 0 : i32
    %2 = arith.cmpi ne, %1, %c0_i32_0 : i32
    scf.if %2 {
      %cst_11 = arith.constant 0.000000e+00 : f32
      %13 = vector.broadcast %cst_11 : f32 to vector<8x128xf32>
      %c0_12 = arith.constant 0 : index
      %c0_13 = arith.constant 0 : index
      %14 = vector.load %arg8[%c0_12, %c0_13] : memref<8x128xf32, #tpu.memory_space<vmem>>, vector<8x128xf32>
      tpu.vector_store %arg8[%c0_12, %c0_13], %13 {strides = array<i32>} : memref<8x128xf32, #tpu.memory_space<vmem>>, vector<8x128xf32>,
    } else {
    }
    %c0 = arith.constant 0 : index
    %c0_1 = arith.constant 0 : index
    %3 = vector.load %arg8[%c0, %c0_1] : memref<8x128xf32, #tpu.memory_space<vmem>>, vector<8x128xf32>
    %c0_2 = arith.constant 0 : index
    %c0_3 = arith.constant 0 : index
    %4 = vector.load %arg5[%c0_2, %c0_3] : memref<8x16xf32, #tpu.memory_space<vmem>>, vector<8x16xf32>
    %c0_4 = arith.constant 0 : index
    %c0_5 = arith.constant 0 : index
    %c0_6 = arith.constant 0 : index
    %5 = vector.load %arg4[%c0_4, %c0_5, %c0_6] : memref<1x16x128xf32, #tpu.memory_space<vmem>>, vector<1x16x128xf32>
    %6 = vector.shape_cast %5 : vector<1x16x128xf32> to vector<16x128xf32>
    %cst = arith.constant dense<0.000000e+00> : vector<8x128xf32>
    %7 = tpu.matmul %4, %6, %cst {dimension_numbers = #tpu.dot_dimension_numbers<[1], [0], [0], [1], [0, 0, 1, 1], [], []>} : vector<8x16xf32>, vector<16x128xf32>, vector<8x128xf32> -> vector<8x128xf32>
    %8 = arith.addf %3, %7 : vector<8x128xf32>
    %c0_7 = arith.constant 0 : index
    %c0_8 = arith.constant 0 : index
    %9 = vector.load %arg8[%c0_7, %c0_8] : memref<8x128xf32, #tpu.memory_space<vmem>>, vector<8x128xf32>
    tpu.vector_store %arg8[%c0_7, %c0_8], %8 {strides = array<i32>} : memref<8x128xf32, #tpu.memory_space<vmem>>, vector<8x128xf32>,
    %c0_i32_9 = arith.constant 0 : i32
    %10 = arith.cmpi eq, %arg3, %c0_i32_9 : i32
    %11 = arith.extui %10 : i1 to i32
    %c0_i32_10 = arith.constant 0 : i32
    %12 = arith.cmpi ne, %11, %c0_i32_10 : i32
    scf.if %12 {
      %c0_11 = arith.constant 0 : index
      %c0_12 = arith.constant 0 : index
      %13 = vector.load %arg8[%c0_11, %c0_12] : memref<8x128xf32, #tpu.memory_space<vmem>>, vector<8x128xf32>
      %c0_13 = arith.constant 0 : index
      %c0_14 = arith.constant 0 : index
      %14 = vector.load %arg6[%c0_13, %c0_14] : memref<8x1xf32, #tpu.memory_space<vmem>>, vector<8x1xf32>
      %15 = vector.broadcast %14 : vector<8x1xf32> to vector<8x128xf32>
      %16 = arith.addf %13, %15 : vector<8x128xf32>
      %c0_15 = arith.constant 0 : index
      %c0_16 = arith.constant 0 : index
      %c0_17 = arith.constant 0 : index
      %17 = vector.load %arg7[%c0_15, %c0_16, %c0_17] : memref<1x8x128xf32, #tpu.memory_space<vmem>>, vector<1x8x128xf32>
      %18 = vector.shape_cast %17 : vector<1x8x128xf32> to vector<8x128xf32>
      %19 = vector.shape_cast %16 : vector<8x128xf32> to vector<1x8x128xf32>
      tpu.vector_store %arg7[%c0_15, %c0_16, %c0_17], %19 {strides = array<i32>} : memref<1x8x128xf32, #tpu.memory_space<vmem>>, vector<1x8x128xf32>,
    } else {
    }
    return
  }
  func.func @transform_0(%arg0: i32, %arg1: i32, %arg2: i32, %arg3: i32) -> (i32, i32, i32) {
    %c0_i32 = arith.constant 0 : i32
    return %arg0, %arg3, %arg2 : i32, i32, i32
  }
  func.func @transform_1(%arg0: i32, %arg1: i32, %arg2: i32, %arg3: i32) -> (i32, i32) {
    %c0_i32 = arith.constant 0 : i32
    return %arg1, %arg3 : i32, i32
  }
  func.func @transform_2(%arg0: i32, %arg1: i32, %arg2: i32, %arg3: i32) -> (i32, i32) {
    %c0_i32 = arith.constant 0 : i32
    %c0_i32_0 = arith.constant 0 : i32
    return %arg1, %c0_i32 : i32, i32
  }
  func.func @transform_3(%arg0: i32, %arg1: i32, %arg2: i32, %arg3: i32) -> (i32, i32, i32) {
    %c0_i32 = arith.constant 0 : i32
    return %arg0, %arg1, %arg2 : i32, i32, i32
  }
}

</mosaic_0001>

<llo_original>
// kernel: tpu_custom_call.1
$region0: #{tpu_custom_call.1}
  #allocation0 [shape = 'u32[]', space=smem, size = 0x4, offset = 0x4, fixed_abs, tag = 'smem constant byte address 0x4 - core index']
  #allocation1 [shape = 'u32[144,128]{1,0:T(1,128)}', space=vmem, size = 0x12000, scoped, tag = 'internal scratch']
  #allocation2 [shape = 'f32[8,128]{1,0:T(8,128)}', space=vmem, size = 0x1000, scoped, tag = 'scratch operand']
  %s0 = inlined_call_operand.hbm [shape: f32[2,16,128], index: 0, kind: input, shape index: {}]
  %s1 = inlined_call_operand.vmem [shape: f32[8,16], index: 1, kind: input, shape index: {}]
  %s2 = inlined_call_operand.vmem [shape: f32[8,1], index: 2, kind: input, shape index: {}]
  %s3 = inlined_call_operand.hbm [shape: f32[2,8,128], index: 3, kind: output, shape index: {}]
  %s4 = sld [smem:[#allocation0]]
  $region57: #{tpu_custom_call.1} parent=0
    _
  %s6 = ssub.s32 1, %s4
  %s7 = scalar_select 0, %s6, %s4
  $region1: #{tpu_custom_call.1} parent=0
    #allocation3 [shape = 'u8[16384]{0}', space=vmem, size = 0x4000, scoped, tag = 'input window, operand 0']
    #allocation4 [shape = 's32[2]{0}', space=sflag, size = 0x8, scoped, tag = 'scoped memory for tpu_custom_call.1']
    #allocation5 [shape = 's32[2]{0}', space=sflag, size = 0x8, scoped, tag = 'scoped memory for tpu_custom_call.1']
    #allocation6 [shape = 'u8[8192]{0}', space=vmem, size = 0x2000, scoped, tag = 'output window, operand 0']
    %8 = vsyncpa [#allocation4], 0
    %s9 = scalar_lea.sflag [#allocation4], 1
    %10 = vsyncpa %s9, 0
    %11 = vsyncpa [#allocation5], 0
    %s12 = scalar_lea.sflag [#allocation5], 1
    %13 = vsyncpa %s12, 0
    loop: start=0, step=1, limit=4
    $region2: #{tpu_custom_call.1} parent=1 // loop_pre_header
      _
    $region3: #{tpu_custom_call.1} parent=1 // loop_header
      %s15 = sphi 0, %s19
      %p16 = scmp.ge.s32.totalorder %s15, 4
      %s22 = sphi 0, %s48
      %s23 = sphi 0, %s44
      %s24 = sphi 0, %s40
      %s25 = sphi 0, %s36
      %s26 = sphi 0, %s22
      %s27 = sphi 0, %s23
      %s28 = sphi 0, %s24
      %s29 = sphi 0, %s25
      %s30 = sphi 0, %s26
      %s31 = sphi 0, %s27
      %s32 = sphi 0, %s28
      %s33 = sphi 0, %s29
      %s55 = sphi 0, %s57
      %s58 = sphi 0, %s55
      %s59 = sphi 0, %s58
      %s75 = sphi 0, %s59
      %s83 = sphi 0, %s85
      %s86 = sphi 0, %s83
      %s87 = sphi 0, %s86
      %s103 = sphi 0, %s87
      %s109 = sphi 0, %s111
      %s112 = sphi 0, %s109
      %s113 = sphi 0, %s112
      %s129 = sphi 0, %s113
      %s139 = sphi 0, %s141
      %s142 = sphi 0, %s139
      %s143 = sphi 0, %s142
      %s159 = sphi 0, %s143
    $region4: #{tpu_custom_call.1} parent=1 // loop_header_branch
      %18 = sbr.rel (%p16) target = $region8
    $region5: #{tpu_custom_call.1} parent=1 // loop_body
      %s20 = ssub.s32 %s15, 1
      %s21 = ssub.s32 %s15, 2
      %s34 = sadd.s32 1, %s25
      %p35 = scmp.ge.s32.totalorder %s34, 1
      %s36 = scalar_select %p35, 0, %s34
      %s37 = sadd.s32 1, %s24
      %s38 = scalar_select %p35, %s37, %s24
      %p39 = scmp.ge.s32.totalorder %s38, 1
      %s40 = scalar_select %p39, 0, %s38
      %s41 = sadd.s32 1, %s23
      %s42 = scalar_select %p39, %s41, %s23
      %p43 = scmp.ge.s32.totalorder %s42, 1
      %s44 = scalar_select %p43, 0, %s42
      %s45 = sadd.s32 1, %s22
      %s46 = scalar_select %p43, %s45, %s22
      %p47 = scmp.ge.s32.totalorder %s46, 2
      %s48 = scalar_select %p47, 0, %s46
      %s49 = ssub.s32 %s22, %s48
      %s50 = ssub.s32 %s25, %s36
      %s51 = sor.u32 %s49, %s50
      %s52 = ssub.s32 %s24, %s40
      %s53 = sor.u32 %s51, %s52
      %p54 = scmp.eq.s32.totalorder %s53, 0
      %s56 = sadd.s32 %s55, 1
      %s57 = scalar_select %p54, %s55, %s56
      %p60 = pneg %p54
      %p61 = scmp.eq.s32.totalorder %s15, 1
      %p62 = por %p60, %p61
      %p63 = scmp.ne.s32.totalorder %s55, %s58
      %p64 = scmp.eq.s32.totalorder %s15, 0
      %p65 = por %p63, %p64
      %p66 = scmp.ne.s32.totalorder %s55, %s58
      %p67 = scmp.eq.s32.totalorder %s20, 1
      %p68 = por %p66, %p67
      %p69 = scmp.ne.s32.totalorder %s58, %s59
      %p70 = scmp.eq.s32.totalorder %s20, 0
      %p71 = por %p69, %p70
      %p72 = scmp.ne.s32.totalorder %s58, %s59
      %p73 = scmp.eq.s32.totalorder %s21, 1
      %p74 = por %p72, %p73
      %p76 = scmp.ne.s32.totalorder %s59, %s75
      %p77 = scmp.eq.s32.totalorder %s21, 0
      %p78 = por %p76, %p77
      %s79 = ssub.s32 %s23, %s44
      %s80 = ssub.s32 %s25, %s36
      %s81 = sor.u32 %s79, %s80
      %p82 = scmp.eq.s32.totalorder %s81, 0
      %s84 = sadd.s32 %s83, 1
      %s85 = scalar_select %p82, %s83, %s84
      %p88 = pneg %p82
      %p89 = scmp.eq.s32.totalorder %s15, 1
      %p90 = por %p88, %p89
      %p91 = scmp.ne.s32.totalorder %s83, %s86
      %p92 = scmp.eq.s32.totalorder %s15, 0
      %p93 = por %p91, %p92
      %p94 = scmp.ne.s32.totalorder %s83, %s86
      %p95 = scmp.eq.s32.totalorder %s20, 1
      %p96 = por %p94, %p95
      %p97 = scmp.ne.s32.totalorder %s86, %s87
      %p98 = scmp.eq.s32.totalorder %s20, 0
      %p99 = por %p97, %p98
      %p100 = scmp.ne.s32.totalorder %s86, %s87
      %p101 = scmp.eq.s32.totalorder %s21, 1
      %p102 = por %p100, %p101
      %p104 = scmp.ne.s32.totalorder %s87, %s103
      %p105 = scmp.eq.s32.totalorder %s21, 0
      %p106 = por %p104, %p105
      %s107 = ssub.s32 %s23, %s44
      %p108 = scmp.eq.s32.totalorder %s107, 0
      %s110 = sadd.s32 %s109, 1
      %s111 = scalar_select %p108, %s109, %s110
      %p114 = pneg %p108
      %p115 = scmp.eq.s32.totalorder %s15, 1
      %p116 = por %p114, %p115
      %p117 = scmp.ne.s32.totalorder %s109, %s112
      %p118 = scmp.eq.s32.totalorder %s15, 0
      %p119 = por %p117, %p118
      %p120 = scmp.ne.s32.totalorder %s109, %s112
      %p121 = scmp.eq.s32.totalorder %s20, 1
      %p122 = por %p120, %p121
      %p123 = scmp.ne.s32.totalorder %s112, %s113
      %p124 = scmp.eq.s32.totalorder %s20, 0
      %p125 = por %p123, %p124
      %p126 = scmp.ne.s32.totalorder %s112, %s113
      %p127 = scmp.eq.s32.totalorder %s21, 1
      %p128 = por %p126, %p127
      %p130 = scmp.ne.s32.totalorder %s113, %s129
      %p131 = scmp.eq.s32.totalorder %s21, 0
      %p132 = por %p130, %p131
      %s133 = ssub.s32 %s22, %s48
      %s134 = ssub.s32 %s23, %s44
      %s135 = sor.u32 %s133, %s134
      %s136 = ssub.s32 %s24, %s40
      %s137 = sor.u32 %s135, %s136
      %p138 = scmp.eq.s32.totalorder %s137, 0
      %s140 = sadd.s32 %s139, 1
      %s141 = scalar_select %p138, %s139, %s140
      %p144 = pneg %p138
      %p145 = scmp.eq.s32.totalorder %s15, 1
      %p146 = por %p144, %p145
      %p147 = scmp.ne.s32.totalorder %s139, %s142
      %p148 = scmp.eq.s32.totalorder %s15, 0
      %p149 = por %p147, %p148
      %p150 = scmp.ne.s32.totalorder %s139, %s142
      %p151 = scmp.eq.s32.totalorder %s20, 1
      %p152 = por %p150, %p151
      %p153 = scmp.ne.s32.totalorder %s142, %s143
      %p154 = scmp.eq.s32.totalorder %s20, 0
      %p155 = por %p153, %p154
      %p156 = scmp.ne.s32.totalorder %s142, %s143
      %p157 = scmp.eq.s32.totalorder %s21, 1
      %p158 = por %p156, %p157
      %p160 = scmp.ne.s32.totalorder %s143, %s159
      %p161 = scmp.eq.s32.totalorder %s21, 0
      %p162 = por %p160, %p161
      %p163 = scmp.le.s32.totalorder 1, %s15
      %p164 = scmp.lt.s32.totalorder %s15, 3
      %p165 = pnand %p163, %p164
      %p166 = pneg %p165
      // Predicated region
      $region9: #{tpu_custom_call.1} parent=5 // pred_check
        _
      $region10: #{tpu_custom_call.1} parent=5 // pred_check_branch
        %168 = sbr.rel (%p165) target = $region12
      $region11: #{tpu_custom_call.1} parent=5 // pred_region
        %s169 = ssub.s32 %s15, 1
        // Predicated region
        $region13: #{tpu_custom_call.1} parent=11 // pred_check
          %p170 = pneg %p99
        $region14: #{tpu_custom_call.1} parent=11 // pred_check_branch
          %172 = sbr.rel (%p170) target = $region16
        $region15: #{tpu_custom_call.1} parent=11 // pred_region
          %p173 = scmp.lt.s32.totalorder %s27, 0
          %s174 = scalar_select %p173, %s27, 0
          %p175 = scmp.lt.s32.totalorder %s29, 0
          %s176 = scalar_select %p175, %s29, 0
          %s177 = sadd.s32 %s176, %s174
          %s178 = smul.addr %s177, 8
          %s179 = scalar_lea.vmem %s1, %s178
        $region16: #{tpu_custom_call.1} parent=11 // pred_fallthru
          _
        // Predicated region
        $region17: #{tpu_custom_call.1} parent=11 // pred_check
          %p180 = pneg %p125
        $region18: #{tpu_custom_call.1} parent=11 // pred_check_branch
          %182 = sbr.rel (%p180) target = $region20
        $region19: #{tpu_custom_call.1} parent=11 // pred_region
          %p183 = scmp.lt.s32.totalorder %s27, 0
          %s184 = scalar_select %p183, %s27, 0
          %s185 = smul.addr %s184, 8
          %s186 = scalar_lea.vmem %s2, %s185
        $region20: #{tpu_custom_call.1} parent=11 // pred_fallthru
          _
      $region12: #{tpu_custom_call.1} parent=5 // pred_fallthru
        _
      %p187 = scmp.lt.s32.totalorder %s15, 2
      // Predicated region
      $region21: #{tpu_custom_call.1} parent=5 // pred_check
        %p188 = pneg %p187
      $region22: #{tpu_custom_call.1} parent=5 // pred_check_branch
        %190 = sbr.rel (%p188) target = $region24
      $region23: #{tpu_custom_call.1} parent=5 // pred_region
        // Predicated region
        $region25: #{tpu_custom_call.1} parent=23 // pred_check
          %p191 = pneg %p65
        $region26: #{tpu_custom_call.1} parent=23 // pred_check_branch
          %193 = sbr.rel (%p191) target = $region28
        $region27: #{tpu_custom_call.1} parent=23 // pred_region
          %s194 = sand.u32 %s55, 1
          %s195 = scalar_lea.sflag [#allocation4], %s194
          %s196 = sand.u32 %s55, 1
          %s197 = smul.addr %s196, 16
          %s198 = scalar_lea.vmem [#allocation3], %s197
          %s199 = smul.u32 2, %s25
          %s201 = ssub.s32 256, 256
          %202 = vsyncadd %s195, %s201
          %s203 = sadd.s32 %s24, %s199
          %s204 = smul.addr %s22, 2
          %s205 = sadd.s32 %s203, %s204
          %s206 = smul.addr %s205, 128
          %s207 = scalar_lea.hbm %s0, %s206
          %s208 = sshll.u32 %s198, 4
          %s209 = int_to_ptr.vmem [resolvable:$true] %s208
          %214 = dma.hbm_to_vmem [thread:$0]  %s207, 256, %s209, %s195, 128, 128, 8
        $region28: #{tpu_custom_call.1} parent=23 // pred_fallthru
          _
      $region24: #{tpu_custom_call.1} parent=5 // pred_fallthru
        _
      %p215 = scmp.le.s32.totalorder 1, %s15
      %p216 = scmp.lt.s32.totalorder %s15, 3
      %p217 = pnand %p215, %p216
      %p218 = pneg %p217
      // Predicated region
      $region29: #{tpu_custom_call.1} parent=5 // pred_check
        _
      $region30: #{tpu_custom_call.1} parent=5 // pred_check_branch
        %220 = sbr.rel (%p217) target = $region32
      $region31: #{tpu_custom_call.1} parent=5 // pred_region
        %s221 = ssub.s32 %s15, 1
        %s222 = sand.u32 %s58, 1
        %s223 = scalar_lea.sflag [#allocation4], %s222
        %s224 = sand.u32 %s58, 1
        %s225 = smul.addr %s224, 16
        %s226 = scalar_lea.vmem [#allocation3], %s225
        // Predicated region
        $region33: #{tpu_custom_call.1} parent=31 // pred_check
          %p227 = pneg %p71
        $region34: #{tpu_custom_call.1} parent=31 // pred_check_branch
          %229 = sbr.rel (%p227) target = $region36
        $region35: #{tpu_custom_call.1} parent=31 // pred_region
          %230 = dma.done %s223, 256
        $region36: #{tpu_custom_call.1} parent=31 // pred_fallthru
          _
        %s231 = sand.u32 %s58, 1
        %s232 = scalar_lea.sflag [#allocation4], %s231
        %s233 = sand.u32 %s58, 1
        %s234 = smul.addr %s233, 16
        %s235 = scalar_lea.vmem [#allocation3], %s234
        %p236 = pneg %p71
        %p237 = pneg %p68
        %p238 = scmp.lt.s32.totalorder %s27, 0
        %s239 = scalar_select %p238, %s27, 0
        %p240 = scmp.lt.s32.totalorder %s29, 0
        %s241 = scalar_select %p240, %s29, 0
        %s242 = sadd.s32 %s241, %s239
        %s243 = smul.addr %s242, 8
        %s244 = scalar_lea.vmem %s1, %s243
        %p245 = pneg %p99
        %p246 = pneg %p96
        %p247 = scmp.lt.s32.totalorder %s27, 0
        %s248 = scalar_select %p247, %s27, 0
        %s249 = smul.addr %s248, 8
        %s250 = scalar_lea.vmem %s2, %s249
        %p251 = pneg %p125
        %p252 = pneg %p122
        %p253 = pneg %p155
        %p254 = pneg %p152
        %s255 = sand.u32 %s142, 1
        %s256 = scalar_lea.sflag [#allocation5], %s255
        %s257 = sand.u32 %s142, 1
        %s258 = smul.addr %s257, 8
        %s259 = scalar_lea.vmem [#allocation6], %s258
        %s260 = smul.u32 2, %s29
        %p261 = scmp.lt.s32.totalorder %s27, 0
        %s262 = scalar_select %p261, %s27, 0
        %p263 = scmp.lt.s32.totalorder %s29, 0
        %s264 = scalar_select %p263, %s29, 0
        %s265 = sadd.s32 %s264, %s262
        %s266 = smul.addr %s265, 8
        %s267 = scalar_lea.vmem %s1, %s266
        %p268 = scmp.lt.s32.totalorder %s27, 0
        %s269 = scalar_select %p268, %s27, 0
        %s270 = smul.addr %s269, 8
        %s271 = scalar_lea.vmem %s2, %s270
        %p272 = scmp.eq.s32.totalorder %s29, 0
        // Predicated region
        $region37: #{tpu_custom_call.1} parent=31 // pred_check
          %p273 = pneg %p272
        $region38: #{tpu_custom_call.1} parent=31 // pred_check_branch
          %275 = sbr.rel (%p273) target = $region40
        $region39: #{tpu_custom_call.1} parent=31 // pred_region
          %276 = vst [vmem:[#allocation2] sm:$0xff] 0.0
        $region40: #{tpu_custom_call.1} parent=31 // pred_fallthru
          _
        %v277 = vld [vmem:[#allocation2] sm:$0xff]
        %v278 = vld [vmem:[%s267] sm:$0xff]
        %v279 = vld [vmem:[%s226] sm:$0xff]
        %v280 = vld [vmem:[%s226 + $0x8] sm:$0xff]
        %vm281 = vcmask 130048
        %v283 = vsel %vm281, %v278, 0
        %285 = vmatprep.subr.mxu0 0.0
        %286 = vmatpush1.msra.mxu0 %v279
        %287 = vmatprep.subr.mxu0 0.0
        %288 = vmatpush1.msra.mxu0 %v280
        %289 = vmatprep.subr.mxu0 0.0
        %290 = vmatpush1.msra.mxu0 0.0
        %291 = vmatprep.subr.mxu0 0.0
        %292 = vmatpush1.msra.mxu0 0.0
        %293 = vmatprep.subr.mxu0 0.0
        %294 = vmatpush1.msra.mxu0 0.0
        %295 = vmatprep.subr.mxu0 0.0
        %296 = vmatpush1.msra.mxu0 0.0
        %297 = vmatprep.subr.mxu0 0.0
        %298 = vmatpush1.msra.mxu0 0.0
        %299 = vmatprep.subr.mxu0 0.0
        %300 = vmatpush1.msra.mxu0 0.0
        %301 = vmatprep.subr.mxu0 0.0
        %302 = vmatpush1.msra.mxu0 0.0
        %303 = vmatprep.subr.mxu0 0.0
        %304 = vmatpush1.msra.mxu0 0.0
        %305 = vmatprep.subr.mxu0 0.0
        %306 = vmatpush1.msra.mxu0 0.0
        %307 = vmatprep.subr.mxu0 0.0
        %308 = vmatpush1.msra.mxu0 0.0
        %309 = vmatprep.subr.mxu0 0.0
        %310 = vmatpush1.msra.mxu0 0.0
        %311 = vmatprep.subr.mxu0 0.0
        %312 = vmatpush1.msra.mxu0 0.0
        %313 = vmatprep.subr.mxu0 0.0
        %314 = vmatpush1.msra.mxu0 0.0
        %315 = vmatprep.subr.mxu0 0.0
        %316 = vmatpush1.msra.mxu0 0.0
        %317 = vmatprep.subr.mxu0 0.0
        %318 = vmatpush1.msra.mxu0 0.0
        %319 = vmatprep.subr.mxu0 0.0
        %320 = vmatpush1.msra.mxu0 0.0
        %321 = vmatprep.subr.mxu0 0.0
        %322 = vmatpush1.msra.mxu0 0.0
        %323 = vmatprep.subr.mxu0 0.0
        %324 = vmatpush1.msra.mxu0 0.0
        %325 = vmatprep.subr.mxu0 0.0
        %326 = vmatpush1.msra.mxu0 0.0
        %327 = vmatprep.subr.mxu0 0.0
        %328 = vmatpush1.msra.mxu0 0.0
        %329 = vmatprep.subr.mxu0 0.0
        %330 = vmatpush1.msra.mxu0 0.0
        %331 = vmatprep.subr.mxu0 0.0
        %332 = vmatpush1.msra.mxu0 0.0
        %333 = vmatprep.subr.mxu0 0.0
        %334 = vmatpush1.msra.mxu0 0.0
        %335 = vmatprep.subr.mxu0 0.0
        %336 = vmatpush1.msra.mxu0 0.0
        %337 = vmatprep.subr.mxu0 0.0
        %338 = vmatpush1.msra.mxu0 0.0
        %339 = vmatprep.subr.mxu0 0.0
        %340 = vmatpush1.msra.mxu0 0.0
        %341 = vmatprep.subr.mxu0 0.0
        %342 = vmatpush1.msra.mxu0 0.0
        %343 = vmatprep.subr.mxu0 0.0
        %344 = vmatpush1.msra.mxu0 0.0
        %345 = vmatprep.subr.mxu0 0.0
        %346 = vmatpush1.msra.mxu0 0.0
        %347 = vmatprep.subr.mxu0 0.0
        %348 = vmatpush1.msra.mxu0 0.0
        %349 = vmatprep.mubr.f32.mxu0 0.0
        %350 = vmatmul.mubr.f32.gmra.mrb[0].mxu0 %v283
        %v351 = vpop.f32.mrb[0].mxu0
        %v352 = vadd.f32 0.0, %v351
        %v353 = vpop.f32.mrb[0].mxu0
        %354 = vdwg.mxu0
        %v355 = vadd.f32 %v277, %v352
        %356 = vst [vmem:[#allocation2] sm:$0xff] %v355
        // Predicated region
        $region41: #{tpu_custom_call.1} parent=31 // pred_check
          %p357 = pneg %p272
        $region42: #{tpu_custom_call.1} parent=31 // pred_check_branch
          %359 = sbr.rel (%p357) target = $region44
        $region43: #{tpu_custom_call.1} parent=31 // pred_region
          %v360 = vld [vmem:[#allocation2] sm:$0xff]
          %v361 = vld [vmem:[%s271] sm:$0xff]
          %363 = vset.pattern.permute.xlu0 0
          %364 = vperm.xlu0 %363, %v361
          %v365 = vpop.permute.xlu0 %364
          %v367 = vadd.f32 %v360, %v365
          %368 = vst [vmem:[%s259] sm:$0xff] %v367
        $region44: #{tpu_custom_call.1} parent=31 // pred_fallthru
          _
        %s369 = sand.u32 %s142, 1
        %s370 = scalar_lea.sflag [#allocation5], %s369
        %s371 = sand.u32 %s142, 1
        %s372 = smul.addr %s371, 8
        %s373 = scalar_lea.vmem [#allocation6], %s372
        // Predicated region
        $region45: #{tpu_custom_call.1} parent=31 // pred_check
          %p374 = pneg %p152
        $region46: #{tpu_custom_call.1} parent=31 // pred_check_branch
          %376 = sbr.rel (%p374) target = $region48
        $region47: #{tpu_custom_call.1} parent=31 // pred_region
          %s378 = ssub.s32 128, 128
          %379 = vsyncadd %s370, %s378
          %s380 = sadd.s32 %s28, %s27
          %s381 = sadd.s32 %s380, %s26
          %s382 = smul.addr %s381, 128
          %s383 = scalar_lea.hbm %s3, %s382
          %s385 = sshll.u32 %s373, 4
          %s386 = int_to_ptr.vmem [resolvable:$true] %s385
          %388 = dma.vmem_to_hbm [thread:$0]  %s386, 128, %s383, %s370
        $region48: #{tpu_custom_call.1} parent=31 // pred_fallthru
          _
      $region32: #{tpu_custom_call.1} parent=5 // pred_fallthru
        _
      %p389 = scmp.le.s32.totalorder 2, %s15
      // Predicated region
      $region49: #{tpu_custom_call.1} parent=5 // pred_check
        %p390 = pneg %p389
      $region50: #{tpu_custom_call.1} parent=5 // pred_check_branch
        %392 = sbr.rel (%p390) target = $region52
      $region51: #{tpu_custom_call.1} parent=5 // pred_region
        %s393 = ssub.s32 %s15, 2
        // Predicated region
        $region53: #{tpu_custom_call.1} parent=51 // pred_check
          %p394 = pneg %p158
        $region54: #{tpu_custom_call.1} parent=51 // pred_check_branch
          %396 = sbr.rel (%p394) target = $region56
        $region55: #{tpu_custom_call.1} parent=51 // pred_region
          %s397 = sand.u32 %s143, 1
          %s398 = scalar_lea.sflag [#allocation5], %s397
          %s399 = sand.u32 %s143, 1
          %s400 = smul.addr %s399, 8
          %s401 = scalar_lea.vmem [#allocation6], %s400
          %402 = dma.done %s398, 128
        $region56: #{tpu_custom_call.1} parent=51 // pred_fallthru
          _
      $region52: #{tpu_custom_call.1} parent=5 // pred_fallthru
        _
    $region6: #{tpu_custom_call.1} parent=1 // loop_footer
      %s19 = sadd.s32 1, %s15
    $region7: #{tpu_custom_call.1} parent=1 // loop_footer_branch
      %14 = sbr.rel target = $region3
    $region8: #{tpu_custom_call.1} parent=1 // loop_exit
      _
    %403 = vsyncpa [#allocation4], 1
    %s404 = scalar_lea.sflag [#allocation4], 1
    %405 = vsyncpa %s404, 1
    %406 = vsyncpa [#allocation5], 1
    %s407 = scalar_lea.sflag [#allocation5], 1
    %408 = vsyncpa %s407, 1

</llo_original>
